<compile_context>
chip_gen: v7x
topology: tpu7x:2x2x1
jax: 0.10.0
libtpu: 0.0.40
codegen_flags: <defaults>
</compile_context>

<pallas_src>
import math
import functools

import jax
import jax.numpy as jnp
from jax.experimental import pallas as pl
from jax.experimental.pallas import tpu as pltpu

_MIB = 1024 * 1024


def _round_up(x, m):
    return ((x + m - 1) // m) * m


def _gelu_exact(x):
    # torch nn.GELU() default == exact (erf) formulation.
    return 0.5 * x * (1.0 + jax.lax.erf(x * (1.0 / math.sqrt(2.0))))


def ffn_kernel(x_ref, w1_ref, b1_ref, w2_ref, b2_ref, o_ref, *, compute_dtype):
    # x_ref: (tile_n, dim); w1_ref: (dim, inner); b1_ref: (1, inner)
    # w2_ref: (inner, dim_out); b2_ref: (1, dim_out); o_ref: (tile_n, dim_out)
    x = x_ref[...].astype(compute_dtype)
    w1 = w1_ref[...].astype(compute_dtype)
    h = jnp.dot(x, w1, preferred_element_type=jnp.float32)
    h = h + b1_ref[...].astype(jnp.float32)
    h = _gelu_exact(h)
    # Dropout(p=0.0) is the identity — nothing to do.
    w2 = w2_ref[...].astype(compute_dtype)
    o = jnp.dot(h.astype(compute_dtype), w2, preferred_element_type=jnp.float32)
    o = o + b2_ref[...].astype(jnp.float32)
    o_ref[...] = o.astype(o_ref.dtype)


def _vmem_budget_bytes():
    """~85% of per-core VMEM; falls back to the smallest generation (v7x, 64 MiB)."""
    try:
        cap = int(pltpu.get_tpu_info().vmem_capacity_bytes)
    except Exception:
        cap = 64 * _MIB
    return int(cap * 0.85)


def _vmem_estimate_bytes(tile_n, dim, inner, dim_out, x_bytes, w_bytes, cd_bytes,
                         weight_buffers):
    weights = weight_buffers * (dim * inner + inner + inner * dim_out + dim_out) * w_bytes
    io_tiles = 2 * tile_n * (dim + dim_out) * x_bytes        # double-buffered x / out
    hidden = tile_n * inner * (4 + cd_bytes)                 # f32 h + its cast copy
    return weights + io_tiles + hidden


def _build_call(n, dim, inner, dim_out, tile_n, out_dtype, compute_dtype,
                vmem_limit_bytes, cost_estimate, single_buffer_weights):
    def weight_spec(shape):
        # Weights / biases are identical for every grid step (constant index_map),
        # so Pallas fetches them once; single-buffering just halves their VMEM.
        if single_buffer_weights:
            return pl.BlockSpec(shape, lambda i: (0, 0),
                                pipeline_mode=pl.Buffered(1))
        return pl.BlockSpec(shape, lambda i: (0, 0))

    grid = (pl.cdiv(n, tile_n),)
    return pl.pallas_call(
        functools.partial(ffn_kernel, compute_dtype=compute_dtype),
        out_shape=jax.ShapeDtypeStruct((n, dim_out), out_dtype),
        grid_spec=pltpu.PrefetchScalarGridSpec(
            num_scalar_prefetch=0,
            grid=grid,
            in_specs=[
                pl.BlockSpec((tile_n, dim), lambda i: (i, 0)),
                weight_spec((dim, inner)),
                weight_spec((1, inner)),
                weight_spec((inner, dim_out)),
                weight_spec((1, dim_out)),
            ],
            out_specs=pl.BlockSpec((tile_n, dim_out), lambda i: (i, 0)),
        ),
        compiler_params=pltpu.CompilerParams(
            dimension_semantics=("parallel",),
            vmem_limit_bytes=vmem_limit_bytes),
        cost_estimate=cost_estimate,
    )


def feedforward_pallas(feats, w1, b1, w2, b2, *, tile_n=512, compute_dtype=None):
    """feats: [N, dim].  Returns [N, dim_out] = Linear -> GELU -> Linear (feats)."""
    n, dim = feats.shape
    inner = w1.shape[1]
    dim_out = w2.shape[1]

    cd = jnp.dtype(compute_dtype) if compute_dtype is not None else jnp.dtype(feats.dtype)
    x_bytes = jnp.dtype(feats.dtype).itemsize
    w_bytes = jnp.dtype(w1.dtype).itemsize
    cd_bytes = cd.itemsize

    # Row tile: as large as possible (fewer grid steps, full MXU rows), clamped to
    # the problem size and to the per-core VMEM budget.  Conservatively budget with
    # double-buffered weights so the fallback path also fits.
    budget = _vmem_budget_bytes()
    tile_n = max(8, min(_round_up(tile_n, 8), _round_up(n, 8)))
    while tile_n > 8 and _vmem_estimate_bytes(
            tile_n, dim, inner, dim_out, x_bytes, w_bytes, cd_bytes, 2) > budget:
        tile_n = max(8, _round_up(tile_n // 2, 8))
    # TODO(synk): if the weights alone ever exceed the VMEM budget (huge dim /
    # inner_dim), add an inner-dim (K) grid axis with an f32 VMEM accumulator.

    est = _vmem_estimate_bytes(tile_n, dim, inner, dim_out, x_bytes, w_bytes,
                               cd_bytes, 2)
    vmem_limit = int(min(budget, max(32 * _MIB, int(est * 1.25) + 4 * _MIB)))

    cost = pl.CostEstimate(
        flops=2 * n * dim * inner + 2 * n * inner * dim_out,
        transcendentals=n * inner,                      # erf inside the GELU
        bytes_accessed=n * (dim + dim_out) * x_bytes
        + (dim * inner + inner + inner * dim_out + dim_out) * w_bytes,
    )

    args = (feats, w1, b1, w2, b2)
    use_single = hasattr(pl, "Buffered")
    try:
        return _build_call(n, dim, inner, dim_out, tile_n, feats.dtype, cd,
                           vmem_limit, cost, use_single)(*args)
    except Exception:
        if not use_single:
            raise
        # Some JAX builds reject Buffered(1) on a top-level BlockSpec; retry with
        # the default (double-buffered) weight specs — a perf-only difference.
        return _build_call(n, dim, inner, dim_out, tile_n, feats.dtype, cd,
                           vmem_limit, cost, False)(*args)


def feedforward_sparse(coords, feats, w1, b1, w2, b2, **kwargs):
    """Mirrors FeedForward.forward on a SparseTensor-like (coords, feats) pair.

    Coordinates / cmaps / kmaps / stride are pure pass-through metadata in the
    original module; only the feature MLP is compute.
    """
    nfeats = feedforward_pallas(feats, w1, b1, w2, b2, **kwargs)
    return coords, nfeats


def init_params(key, dim, inner_dim, dim_out, dtype=jnp.float32):
    """Deterministic nn.Linear-style init (uniform +-1/sqrt(fan_in))."""
    k1, k2, k3, k4 = jax.random.split(key, 4)
    lim1 = 1.0 / math.sqrt(dim)
    lim2 = 1.0 / math.sqrt(inner_dim)
    w1 = jax.random.uniform(k1, (dim, inner_dim), dtype, -lim1, lim1)
    b1 = jax.random.uniform(k2, (1, inner_dim), dtype, -lim1, lim1)
    w2 = jax.random.uniform(k3, (inner_dim, dim_out), dtype, -lim2, lim2)
    b2 = jax.random.uniform(k4, (1, dim_out), dtype, -lim2, lim2)
    return w1, b1, w2, b2


def reference(feats, w1, b1, w2, b2):
    h = feats @ w1 + b1
    h = _gelu_exact(h)
    return h @ w2 + b2


if __name__ == "__main__":
    key = jax.random.PRNGKey(0)
    kx, kc, kp = jax.random.split(key, 3)

    # Small SparseTensor-like problem: 2 batches x 32 points = 64 rows, dim=32.
    dim = 32
    mult = 4
    inner_dim = dim * mult           # 128
    dim_out = dim                    # default(dim_out, dim)
    n_points = 64                    # total sparse points across both batches

    feats = jax.random.normal(kx, (n_points, dim), dtype=jnp.float32)
    # coords: [N, 4] = (batch, x, y, z) — metadata only, passed through.
    batch_col = jnp.concatenate(
        [jnp.zeros((n_points // 2, 1), jnp.int32),
         jnp.ones((n_points // 2, 1), jnp.int32)], axis=0)
    xyz = jax.random.randint(kc, (n_points, 3), 0, 16, dtype=jnp.int32)
    coords = jnp.concatenate([batch_col, xyz], axis=-1)

    w1, b1, w2, b2 = init_params(kp, dim, inner_dim, dim_out)
    ref = reference(feats, w1, b1, w2, b2)

    # 1) f32 path — exact-GELU parity with the reference.
    out_coords, out_feats = feedforward_sparse(coords, feats, w1, b1, w2, b2)
    out_feats = jax.block_until_ready(out_feats)
    assert out_coords.shape == coords.shape
    assert out_feats.shape == (n_points, dim_out)
    assert jnp.allclose(out_feats, ref, atol=1e-5, rtol=1e-5), (
        float(jnp.max(jnp.abs(out_feats - ref))))

    # 2) Ragged-grid path (tile does not divide N): masked write-back, no padding.
    out_ragged = jax.block_until_ready(
        feedforward_pallas(feats, w1, b1, w2, b2, tile_n=48))
    assert out_ragged.shape == (n_points, dim_out)
    assert jnp.allclose(out_ragged, ref, atol=1e-5, rtol=1e-5), (
        float(jnp.max(jnp.abs(out_ragged - ref))))

    # 3) bf16 MXU-input fast path (v6e/v7x); f32 accumulation, looser tolerance.
    out_bf16 = jax.block_until_ready(
        feedforward_pallas(feats, w1, b1, w2, b2, compute_dtype=jnp.bfloat16))
    assert out_bf16.shape == (n_points, dim_out)
    assert jnp.allclose(out_bf16, ref, atol=1e-1, rtol=1e-1), (
        float(jnp.max(jnp.abs(out_bf16 - ref))))

    # TODO(synk): cmaps/kmaps/stride caches of the SparseTensor are opaque
    # metadata with no compute; they are simply carried alongside (not modeled).
    print("KERNEL_OK")
</pallas_src>

<mosaic_0001>
module attributes {stable_mosaic.version = 11 : i64} {
  func.func @ffn_kernel(%arg0: i32, %arg1: memref<64x32xf32, #tpu.memory_space<vmem>>, %arg2: memref<32x128xf32, #tpu.memory_space<vmem>>, %arg3: memref<1x128xf32, #tpu.memory_space<vmem>>, %arg4: memref<128x32xf32, #tpu.memory_space<vmem>>, %arg5: memref<1x32xf32, #tpu.memory_space<vmem>>, %arg6: memref<64x32xf32, #tpu.memory_space<vmem>>) attributes {dimension_semantics = [#tpu.dimension_semantics<parallel>], iteration_bounds = array<i64: 1>, scalar_prefetch = 0 : i64, scratch_operands = 0 : i64, tpu.core_type = #tpu.core_type<tc>, window_params = [{transform_indices = @transform_0, window_bounds = array<i64: 64, 32>}, {pipeline_mode = #tpu.pipeline_mode<synchronous>, transform_indices = @transform_1, window_bounds = array<i64: 32, 128>}, {pipeline_mode = #tpu.pipeline_mode<synchronous>, transform_indices = @transform_2, window_bounds = array<i64: 1, 128>}, {pipeline_mode = #tpu.pipeline_mode<synchronous>, transform_indices = @transform_3, window_bounds = array<i64: 128, 32>}, {pipeline_mode = #tpu.pipeline_mode<synchronous>, transform_indices = @transform_4, window_bounds = array<i64: 1, 32>}, {transform_indices = @transform_5, window_bounds = array<i64: 64, 32>}]} {
    %c0 = arith.constant 0 : index
    %c0_0 = arith.constant 0 : index
    %0 = vector.load %arg1[%c0, %c0_0] : memref<64x32xf32, #tpu.memory_space<vmem>>, vector<64x32xf32>
    %c0_1 = arith.constant 0 : index
    %c0_2 = arith.constant 0 : index
    %1 = vector.load %arg2[%c0_1, %c0_2] : memref<32x128xf32, #tpu.memory_space<vmem>>, vector<32x128xf32>
    %cst = arith.constant dense<0.000000e+00> : vector<64x128xf32>
    %2 = tpu.matmul %0, %1, %cst {dimension_numbers = #tpu.dot_dimension_numbers<[1], [0], [0], [1], [0, 0, 1, 1], [], []>} : vector<64x32xf32>, vector<32x128xf32>, vector<64x128xf32> -> vector<64x128xf32>
    %c0_3 = arith.constant 0 : index
    %c0_4 = arith.constant 0 : index
    %3 = vector.load %arg3[%c0_3, %c0_4] : memref<1x128xf32, #tpu.memory_space<vmem>>, vector<1x128xf32>
    %4 = vector.broadcast %3 : vector<1x128xf32> to vector<64x128xf32>
    %5 = arith.addf %2, %4 : vector<64x128xf32>
    %cst_5 = arith.constant 5.000000e-01 : f32
    %6 = vector.broadcast %cst_5 : f32 to vector<64x128xf32>
    %7 = arith.mulf %6, %5 : vector<64x128xf32>
    %cst_6 = arith.constant 0.707106769 : f32
    %8 = vector.broadcast %cst_6 : f32 to vector<64x128xf32>
    %9 = arith.mulf %5, %8 : vector<64x128xf32>
    %10 = math.erf %9 : vector<64x128xf32>
    %cst_7 = arith.constant 1.000000e+00 : f32
    %11 = vector.broadcast %cst_7 : f32 to vector<64x128xf32>
    %12 = arith.addf %11, %10 : vector<64x128xf32>
    %13 = arith.mulf %7, %12 : vector<64x128xf32>
    %c0_8 = arith.constant 0 : index
    %c0_9 = arith.constant 0 : index
    %14 = vector.load %arg4[%c0_8, %c0_9] : memref<128x32xf32, #tpu.memory_space<vmem>>, vector<128x32xf32>
    %cst_10 = arith.constant dense<0.000000e+00> : vector<64x32xf32>
    %15 = tpu.matmul %13, %14, %cst_10 {dimension_numbers = #tpu.dot_dimension_numbers<[1], [0], [0], [1], [0, 0, 1, 1], [], []>} : vector<64x128xf32>, vector<128x32xf32>, vector<64x32xf32> -> vector<64x32xf32>
    %c0_11 = arith.constant 0 : index
    %c0_12 = arith.constant 0 : index
    %16 = vector.load %arg5[%c0_11, %c0_12] : memref<1x32xf32, #tpu.memory_space<vmem>>, vector<1x32xf32>
    %17 = vector.broadcast %16 : vector<1x32xf32> to vector<64x32xf32>
    %18 = arith.addf %15, %17 : vector<64x32xf32>
    %c0_13 = arith.constant 0 : index
    %c0_14 = arith.constant 0 : index
    %19 = vector.load %arg6[%c0_13, %c0_14] : memref<64x32xf32, #tpu.memory_space<vmem>>, vector<64x32xf32>
    tpu.vector_store %arg6[%c0_13, %c0_14], %18 {strides = array<i32>} : memref<64x32xf32, #tpu.memory_space<vmem>>, vector<64x32xf32>,
    return
  }
  func.func @transform_0(%arg0: i32) -> (i32, i32) {
    %c0_i32 = arith.constant 0 : i32
    %c0_i32_0 = arith.constant 0 : i32
    return %arg0, %c0_i32 : i32, i32
  }
  func.func @transform_1(%arg0: i32) -> (i32, i32) {
    %c0_i32 = arith.constant 0 : i32
    %c0_i32_0 = arith.constant 0 : i32
    %c0_i32_1 = arith.constant 0 : i32
    return %c0_i32, %c0_i32_0 : i32, i32
  }
  func.func @transform_2(%arg0: i32) -> (i32, i32) {
    %c0_i32 = arith.constant 0 : i32
    %c0_i32_0 = arith.constant 0 : i32
    %c0_i32_1 = arith.constant 0 : i32
    return %c0_i32, %c0_i32_0 : i32, i32
  }
  func.func @transform_3(%arg0: i32) -> (i32, i32) {
    %c0_i32 = arith.constant 0 : i32
    %c0_i32_0 = arith.constant 0 : i32
    %c0_i32_1 = arith.constant 0 : i32
    return %c0_i32, %c0_i32_0 : i32, i32
  }
  func.func @transform_4(%arg0: i32) -> (i32, i32) {
    %c0_i32 = arith.constant 0 : i32
    %c0_i32_0 = arith.constant 0 : i32
    %c0_i32_1 = arith.constant 0 : i32
    return %c0_i32, %c0_i32_0 : i32, i32
  }
  func.func @transform_5(%arg0: i32) -> (i32, i32) {
    %c0_i32 = arith.constant 0 : i32
    %c0_i32_0 = arith.constant 0 : i32
    return %arg0, %c0_i32 : i32, i32
  }
}

module attributes {stable_mosaic.version = 11 : i64} {
  func.func @ffn_kernel(%arg0: i32, %arg1: memref<64x32xf32, #tpu.memory_space<vmem>>, %arg2: memref<32x128xf32, #tpu.memory_space<vmem>>, %arg3: memref<1x128xf32, #tpu.memory_space<vmem>>, %arg4: memref<128x32xf32, #tpu.memory_space<vmem>>, %arg5: memref<1x32xf32, #tpu.memory_space<vmem>>, %arg6: memref<64x32xf32, #tpu.memory_space<vmem>>) attributes {dimension_semantics = [#tpu.dimension_semantics<parallel>], iteration_bounds = array<i64: 1>, scalar_prefetch = 0 : i64, scratch_operands = 0 : i64, tpu.core_type = #tpu.core_type<tc>, window_params = [{transform_indices = @transform_0, window_bounds = array<i64: 64, 32>}, {pipeline_mode = #tpu.pipeline_mode<synchronous>, transform_indices = @transform_1, window_bounds = array<i64: 32, 128>}, {pipeline_mode = #tpu.pipeline_mode<synchronous>, transform_indices = @transform_2, window_bounds = array<i64: 1, 128>}, {pipeline_mode = #tpu.pipeline_mode<synchronous>, transform_indices = @transform_3, window_bounds = array<i64: 128, 32>}, {pipeline_mode = #tpu.pipeline_mode<synchronous>, transform_indices = @transform_4, window_bounds = array<i64: 1, 32>}, {transform_indices = @transform_5, window_bounds = array<i64: 64, 32>}]} {
    %c0 = arith.constant 0 : index
    %c0_0 = arith.constant 0 : index
    %0 = vector.load %arg1[%c0, %c0_0] : memref<64x32xf32, #tpu.memory_space<vmem>>, vector<64x32xf32>
    %c0_1 = arith.constant 0 : index
    %c0_2 = arith.constant 0 : index
    %1 = vector.load %arg2[%c0_1, %c0_2] : memref<32x128xf32, #tpu.memory_space<vmem>>, vector<32x128xf32>
    %cst = arith.constant dense<0.000000e+00> : vector<64x128xf32>
    %2 = tpu.matmul %0, %1, %cst {dimension_numbers = #tpu.dot_dimension_numbers<[1], [0], [0], [1], [0, 0, 1, 1], [], []>} : vector<64x32xf32>, vector<32x128xf32>, vector<64x128xf32> -> vector<64x128xf32>
    %c0_3 = arith.constant 0 : index
    %c0_4 = arith.constant 0 : index
    %3 = vector.load %arg3[%c0_3, %c0_4] : memref<1x128xf32, #tpu.memory_space<vmem>>, vector<1x128xf32>
    %4 = vector.broadcast %3 : vector<1x128xf32> to vector<64x128xf32>
    %5 = arith.addf %2, %4 : vector<64x128xf32>
    %cst_5 = arith.constant 5.000000e-01 : f32
    %6 = vector.broadcast %cst_5 : f32 to vector<64x128xf32>
    %7 = arith.mulf %6, %5 : vector<64x128xf32>
    %cst_6 = arith.constant 0.707106769 : f32
    %8 = vector.broadcast %cst_6 : f32 to vector<64x128xf32>
    %9 = arith.mulf %5, %8 : vector<64x128xf32>
    %10 = math.erf %9 : vector<64x128xf32>
    %cst_7 = arith.constant 1.000000e+00 : f32
    %11 = vector.broadcast %cst_7 : f32 to vector<64x128xf32>
    %12 = arith.addf %11, %10 : vector<64x128xf32>
    %13 = arith.mulf %7, %12 : vector<64x128xf32>
    %c0_8 = arith.constant 0 : index
    %c0_9 = arith.constant 0 : index
    %14 = vector.load %arg4[%c0_8, %c0_9] : memref<128x32xf32, #tpu.memory_space<vmem>>, vector<128x32xf32>
    %cst_10 = arith.constant dense<0.000000e+00> : vector<64x32xf32>
    %15 = tpu.matmul %13, %14, %cst_10 {dimension_numbers = #tpu.dot_dimension_numbers<[1], [0], [0], [1], [0, 0, 1, 1], [], []>} : vector<64x128xf32>, vector<128x32xf32>, vector<64x32xf32> -> vector<64x32xf32>
    %c0_11 = arith.constant 0 : index
    %c0_12 = arith.constant 0 : index
    %16 = vector.load %arg5[%c0_11, %c0_12] : memref<1x32xf32, #tpu.memory_space<vmem>>, vector<1x32xf32>
    %17 = vector.broadcast %16 : vector<1x32xf32> to vector<64x32xf32>
    %18 = arith.addf %15, %17 : vector<64x32xf32>
    %c0_13 = arith.constant 0 : index
    %c0_14 = arith.constant 0 : index
    %19 = vector.load %arg6[%c0_13, %c0_14] : memref<64x32xf32, #tpu.memory_space<vmem>>, vector<64x32xf32>
    tpu.vector_store %arg6[%c0_13, %c0_14], %18 {strides = array<i32>} : memref<64x32xf32, #tpu.memory_space<vmem>>, vector<64x32xf32>,
    return
  }
  func.func @transform_0(%arg0: i32) -> (i32, i32) {
    %c0_i32 = arith.constant 0 : i32
    %c0_i32_0 = arith.constant 0 : i32
    return %arg0, %c0_i32 : i32, i32
  }
  func.func @transform_1(%arg0: i32) -> (i32, i32) {
    %c0_i32 = arith.constant 0 : i32
    %c0_i32_0 = arith.constant 0 : i32
    %c0_i32_1 = arith.constant 0 : i32
    return %c0_i32, %c0_i32_0 : i32, i32
  }
  func.func @transform_2(%arg0: i32) -> (i32, i32) {
    %c0_i32 = arith.constant 0 : i32
    %c0_i32_0 = arith.constant 0 : i32
    %c0_i32_1 = arith.constant 0 : i32
    return %c0_i32, %c0_i32_0 : i32, i32
  }
  func.func @transform_3(%arg0: i32) -> (i32, i32) {
    %c0_i32 = arith.constant 0 : i32
    %c0_i32_0 = arith.constant 0 : i32
    %c0_i32_1 = arith.constant 0 : i32
    return %c0_i32, %c0_i32_0 : i32, i32
  }
  func.func @transform_4(%arg0: i32) -> (i32, i32) {
    %c0_i32 = arith.constant 0 : i32
    %c0_i32_0 = arith.constant 0 : i32
    %c0_i32_1 = arith.constant 0 : i32
    return %c0_i32, %c0_i32_0 : i32, i32
  }
  func.func @transform_5(%arg0: i32) -> (i32, i32) {
    %c0_i32 = arith.constant 0 : i32
    %c0_i32_0 = arith.constant 0 : i32
    return %arg0, %c0_i32 : i32, i32
  }
}

</mosaic_0001>

<llo_original>
// kernel: tpu_custom_call.1
$region0: #{tpu_custom_call.1}
  #allocation0 [shape = 'u32[]', space=smem, size = 0x4, offset = 0x4, fixed_abs, tag = 'smem constant byte address 0x4 - core index']
  #allocation1 [shape = 'u32[144,128]{1,0:T(1,128)}', space=vmem, size = 0x12000, scoped, tag = 'internal scratch']
  %s0 = inlined_call_operand.vmem [shape: f32[64,32], index: 0, kind: input, shape index: {}]
  %s1 = inlined_call_operand.vmem [shape: f32[32,128], index: 1, kind: input, shape index: {}]
  %s2 = inlined_call_operand.vmem [shape: f32[1,128], index: 2, kind: input, shape index: {}]
  %s3 = inlined_call_operand.vmem [shape: f32[128,32], index: 3, kind: input, shape index: {}]
  %s4 = inlined_call_operand.vmem [shape: f32[1,32], index: 4, kind: input, shape index: {}]
  %s5 = inlined_call_operand.vmem [shape: f32[64,32], index: 5, kind: output, shape index: {}]
  %s6 = sld [smem:[#allocation0]]
  $region30: #{tpu_custom_call.1} parent=0
    _
  %s8 = ssub.s32 1, %s6
  %s9 = scalar_select 0, %s8, %s6
  // Predicated region
  $region2: #{tpu_custom_call.1} parent=0 // pred_check
    _
  $region3: #{tpu_custom_call.1} parent=0 // pred_check_branch
    %11 = sbr.rel (0) target = $region5
  $region4: #{tpu_custom_call.1} parent=0 // pred_region
    _
  $region5: #{tpu_custom_call.1} parent=0 // pred_fallthru
    _
  // Predicated region
  $region6: #{tpu_custom_call.1} parent=0 // pred_check
    _
  $region7: #{tpu_custom_call.1} parent=0 // pred_check_branch
    %13 = sbr.rel (0) target = $region9
  $region8: #{tpu_custom_call.1} parent=0 // pred_region
    _
  $region9: #{tpu_custom_call.1} parent=0 // pred_fallthru
    _
  // Predicated region
  $region10: #{tpu_custom_call.1} parent=0 // pred_check
    _
  $region11: #{tpu_custom_call.1} parent=0 // pred_check_branch
    %15 = sbr.rel (0) target = $region13
  $region12: #{tpu_custom_call.1} parent=0 // pred_region
    _
  $region13: #{tpu_custom_call.1} parent=0 // pred_fallthru
    _
  // Predicated region
  $region14: #{tpu_custom_call.1} parent=0 // pred_check
    _
  $region15: #{tpu_custom_call.1} parent=0 // pred_check_branch
    %17 = sbr.rel (0) target = $region17
  $region16: #{tpu_custom_call.1} parent=0 // pred_region
    _
  $region17: #{tpu_custom_call.1} parent=0 // pred_fallthru
    _
  // Predicated region
  $region18: #{tpu_custom_call.1} parent=0 // pred_check
    _
  $region19: #{tpu_custom_call.1} parent=0 // pred_check_branch
    %19 = sbr.rel (0) target = $region21
  $region20: #{tpu_custom_call.1} parent=0 // pred_region
    _
  $region21: #{tpu_custom_call.1} parent=0 // pred_fallthru
    _
  %v20 = vld [vmem:[%s0] sm:$0xff]
  %v21 = vld [vmem:[%s0 + $0x8] sm:$0xff]
  %v22 = vld [vmem:[%s0 + $0x10] sm:$0xff]
  %v23 = vld [vmem:[%s0 + $0x18] sm:$0xff]
  %v24 = vld [vmem:[%s0 + $0x20] sm:$0xff]
  %v25 = vld [vmem:[%s0 + $0x28] sm:$0xff]
  %v26 = vld [vmem:[%s0 + $0x30] sm:$0xff]
  %v27 = vld [vmem:[%s0 + $0x38] sm:$0xff]
  %v28 = vld [vmem:[%s1] sm:$0xff]
  %v29 = vld [vmem:[%s1 + $0x8] sm:$0xff]
  %v30 = vld [vmem:[%s1 + $0x10] sm:$0xff]
  %v31 = vld [vmem:[%s1 + $0x18] sm:$0xff]
  %v32 = vld [vmem:[%s2] sm:$0x1]
  %v34 = vlaneseq
  %v35 = vshrl.u32 %v34, 7
  %v36 = vsub.s32 0, %v35
  %v37 = vrot.slane %v32, %v36
  %vm39 = vcmask 261120
  %v41 = vsel %vm39, %v20, 0
  %v44 = vsel %vm39, %v21, 0
  %v47 = vsel %vm39, %v22, 0
  %v50 = vsel %vm39, %v23, 0
  %v53 = vsel %vm39, %v24, 0
  %v56 = vsel %vm39, %v25, 0
  %v59 = vsel %vm39, %v26, 0
  %v62 = vsel %vm39, %v27, 0
  %64 = vmatprep.subr.mxu0 0.0
  %65 = vmatpush1.msra.mxu0 %v28
  %66 = vmatprep.subr.mxu0 0.0
  %67 = vmatpush1.msra.mxu0 %v29
  %68 = vmatprep.subr.mxu0 0.0
  %69 = vmatpush1.msra.mxu0 %v30
  %70 = vmatprep.subr.mxu0 0.0
  %71 = vmatpush1.msra.mxu0 %v31
  %72 = vmatprep.subr.mxu0 0.0
  %73 = vmatpush1.msra.mxu0 0.0
  %74 = vmatprep.subr.mxu0 0.0
  %75 = vmatpush1.msra.mxu0 0.0
  %76 = vmatprep.subr.mxu0 0.0
  %77 = vmatpush1.msra.mxu0 0.0
  %78 = vmatprep.subr.mxu0 0.0
  %79 = vmatpush1.msra.mxu0 0.0
  %80 = vmatprep.subr.mxu0 0.0
  %81 = vmatpush1.msra.mxu0 0.0
  %82 = vmatprep.subr.mxu0 0.0
  %83 = vmatpush1.msra.mxu0 0.0
  %84 = vmatprep.subr.mxu0 0.0
  %85 = vmatpush1.msra.mxu0 0.0
  %86 = vmatprep.subr.mxu0 0.0
  %87 = vmatpush1.msra.mxu0 0.0
  %88 = vmatprep.subr.mxu0 0.0
  %89 = vmatpush1.msra.mxu0 0.0
  %90 = vmatprep.subr.mxu0 0.0
  %91 = vmatpush1.msra.mxu0 0.0
  %92 = vmatprep.subr.mxu0 0.0
  %93 = vmatpush1.msra.mxu0 0.0
  %94 = vmatprep.subr.mxu0 0.0
  %95 = vmatpush1.msra.mxu0 0.0
  %96 = vmatprep.subr.mxu0 0.0
  %97 = vmatpush1.msra.mxu0 0.0
  %98 = vmatprep.subr.mxu0 0.0
  %99 = vmatpush1.msra.mxu0 0.0
  %100 = vmatprep.subr.mxu0 0.0
  %101 = vmatpush1.msra.mxu0 0.0
  %102 = vmatprep.subr.mxu0 0.0
  %103 = vmatpush1.msra.mxu0 0.0
  %104 = vmatprep.subr.mxu0 0.0
  %105 = vmatpush1.msra.mxu0 0.0
  %106 = vmatprep.subr.mxu0 0.0
  %107 = vmatpush1.msra.mxu0 0.0
  %108 = vmatprep.subr.mxu0 0.0
  %109 = vmatpush1.msra.mxu0 0.0
  %110 = vmatprep.subr.mxu0 0.0
  %111 = vmatpush1.msra.mxu0 0.0
  %112 = vmatprep.subr.mxu0 0.0
  %113 = vmatpush1.msra.mxu0 0.0
  %114 = vmatprep.subr.mxu0 0.0
  %115 = vmatpush1.msra.mxu0 0.0
  %116 = vmatprep.subr.mxu0 0.0
  %117 = vmatpush1.msra.mxu0 0.0
  %118 = vmatprep.subr.mxu0 0.0
  %119 = vmatpush1.msra.mxu0 0.0
  %120 = vmatprep.subr.mxu0 0.0
  %121 = vmatpush1.msra.mxu0 0.0
  %122 = vmatprep.subr.mxu0 0.0
  %123 = vmatpush1.msra.mxu0 0.0
  %124 = vmatprep.subr.mxu0 0.0
  %125 = vmatpush1.msra.mxu0 0.0
  %126 = vmatprep.subr.mxu0 0.0
  %127 = vmatpush1.msra.mxu0 0.0
  %128 = vmatprep.mubr.f32.mxu0 0.0
  %129 = vmatmul.mubr.f32.gmra.mrb[0].mxu0 %v41
  %v130 = vpop.f32.mrb[0].mxu0
  %v131 = vadd.f32 %v37, %v130
  %v132 = vpop.f32.mrb[0].mxu0
  %133 = vmatprep.mubr.f32.mxu0 0.0
  %134 = vmatmul.mubr.f32.gmra.mrb[0].mxu0 %v44
  %v135 = vpop.f32.mrb[0].mxu0
  %v136 = vadd.f32 %v37, %v135
  %v137 = vpop.f32.mrb[0].mxu0
  %138 = vmatprep.mubr.f32.mxu0 0.0
  %139 = vmatmul.mubr.f32.gmra.mrb[0].mxu0 %v47
  %v140 = vpop.f32.mrb[0].mxu0
  %v141 = vadd.f32 %v37, %v140
  %v142 = vpop.f32.mrb[0].mxu0
  %143 = vmatprep.mubr.f32.mxu0 0.0
  %144 = vmatmul.mubr.f32.gmra.mrb[0].mxu0 %v50
  %v145 = vpop.f32.mrb[0].mxu0
  %v146 = vadd.f32 %v37, %v145
  %v147 = vpop.f32.mrb[0].mxu0
  %148 = vmatprep.mubr.f32.mxu0 0.0
  %149 = vmatmul.mubr.f32.gmra.mrb[0].mxu0 %v53
  %v150 = vpop.f32.mrb[0].mxu0
  %v151 = vadd.f32 %v37, %v150
  %v152 = vpop.f32.mrb[0].mxu0
  %153 = vmatprep.mubr.f32.mxu0 0.0
  %154 = vmatmul.mubr.f32.gmra.mrb[0].mxu0 %v56
  %v155 = vpop.f32.mrb[0].mxu0
  %v156 = vadd.f32 %v37, %v155
  %v157 = vpop.f32.mrb[0].mxu0
  %158 = vmatprep.mubr.f32.mxu0 0.0
  %159 = vmatmul.mubr.f32.gmra.mrb[0].mxu0 %v59
  %v160 = vpop.f32.mrb[0].mxu0
  %v161 = vadd.f32 %v37, %v160
  %v162 = vpop.f32.mrb[0].mxu0
  %163 = vmatprep.mubr.f32.mxu0 0.0
  %164 = vmatmul.mubr.f32.gmra.mrb[0].mxu0 %v62
  %v165 = vpop.f32.mrb[0].mxu0
  %v166 = vadd.f32 %v37, %v165
  %v167 = vpop.f32.mrb[0].mxu0
  %168 = vdwg.mxu0
  %v169 = vmul.f32 %v131, 0.5
  %v170 = vmul.f32 %v136, 0.5
  %v171 = vmul.f32 %v141, 0.5
  %v172 = vmul.f32 %v146, 0.5
  %v173 = vmul.f32 %v151, 0.5
  %v174 = vmul.f32 %v156, 0.5
  %v175 = vmul.f32 %v161, 0.5
  %v176 = vmul.f32 %v166, 0.5
  %v177 = vmul.f32 %v131, 0.70710677
  %v178 = vmul.f32 %v136, 0.70710677
  %v179 = vmul.f32 %v141, 0.70710677
  %v180 = vmul.f32 %v146, 0.70710677
  %v181 = vmul.f32 %v151, 0.70710677
  %v182 = vmul.f32 %v156, 0.70710677
  %v183 = vmul.f32 %v161, 0.70710677
  %v184 = vmul.f32 %v166, 0.70710677
  %v185 = verf.f32.pop %v177
  %v186 = verf.f32.pop %v178
  %v187 = verf.f32.pop %v179
  %v188 = verf.f32.pop %v180
  %v189 = verf.f32.pop %v181
  %v190 = verf.f32.pop %v182
  %v191 = verf.f32.pop %v183
  %v192 = verf.f32.pop %v184
  %v193 = vadd.f32 %v185, 1.0
  %v194 = vadd.f32 %v186, 1.0
  %v195 = vadd.f32 %v187, 1.0
  %v196 = vadd.f32 %v188, 1.0
  %v197 = vadd.f32 %v189, 1.0
  %v198 = vadd.f32 %v190, 1.0
  %v199 = vadd.f32 %v191, 1.0
  %v200 = vadd.f32 %v192, 1.0
  %v201 = vmul.f32 %v169, %v193
  %v202 = vmul.f32 %v170, %v194
  %v203 = vmul.f32 %v171, %v195
  %v204 = vmul.f32 %v172, %v196
  %v205 = vmul.f32 %v173, %v197
  %v206 = vmul.f32 %v174, %v198
  %v207 = vmul.f32 %v175, %v199
  %v208 = vmul.f32 %v176, %v200
  %v209 = vld [vmem:[%s3] sm:$0xff]
  %v210 = vld [vmem:[%s3 + $0x8] sm:$0xff]
  %v211 = vld [vmem:[%s3 + $0x10] sm:$0xff]
  %v212 = vld [vmem:[%s3 + $0x18] sm:$0xff]
  %v213 = vld [vmem:[%s3 + $0x20] sm:$0xff]
  %v214 = vld [vmem:[%s3 + $0x28] sm:$0xff]
  %v215 = vld [vmem:[%s3 + $0x30] sm:$0xff]
  %v216 = vld [vmem:[%s3 + $0x38] sm:$0xff]
  %v217 = vld [vmem:[%s3 + $0x40] sm:$0xff]
  %v218 = vld [vmem:[%s3 + $0x48] sm:$0xff]
  %v219 = vld [vmem:[%s3 + $0x50] sm:$0xff]
  %v220 = vld [vmem:[%s3 + $0x58] sm:$0xff]
  %v221 = vld [vmem:[%s3 + $0x60] sm:$0xff]
  %v222 = vld [vmem:[%s3 + $0x68] sm:$0xff]
  %v223 = vld [vmem:[%s3 + $0x70] sm:$0xff]
  %v224 = vld [vmem:[%s3 + $0x78] sm:$0xff]
  %v225 = vld [vmem:[%s4] sm:$0x1]
  %v227 = vlaneseq
  %v228 = vshrl.u32 %v227, 7
  %v229 = vsub.s32 0, %v228
  %v230 = vrot.slane %v225, %v229
  %232 = vmatprep.subr.mxu0 0.0
  %233 = vmatpush1.msra.mxu0 %v209
  %234 = vmatprep.subr.mxu0 0.0
  %235 = vmatpush1.msra.mxu0 %v210
  %236 = vmatprep.subr.mxu0 0.0
  %237 = vmatpush1.msra.mxu0 %v211
  %238 = vmatprep.subr.mxu0 0.0
  %239 = vmatpush1.msra.mxu0 %v212
  %240 = vmatprep.subr.mxu0 0.0
  %241 = vmatpush1.msra.mxu0 %v213
  %242 = vmatprep.subr.mxu0 0.0
  %243 = vmatpush1.msra.mxu0 %v214
  %244 = vmatprep.subr.mxu0 0.0
  %245 = vmatpush1.msra.mxu0 %v215
  %246 = vmatprep.subr.mxu0 0.0
  %247 = vmatpush1.msra.mxu0 %v216
  %248 = vmatprep.subr.mxu0 0.0
  %249 = vmatpush1.msra.mxu0 %v217
  %250 = vmatprep.subr.mxu0 0.0
  %251 = vmatpush1.msra.mxu0 %v218
  %252 = vmatprep.subr.mxu0 0.0
  %253 = vmatpush1.msra.mxu0 %v219
  %254 = vmatprep.subr.mxu0 0.0
  %255 = vmatpush1.msra.mxu0 %v220
  %256 = vmatprep.subr.mxu0 0.0
  %257 = vmatpush1.msra.mxu0 %v221
  %258 = vmatprep.subr.mxu0 0.0
  %259 = vmatpush1.msra.mxu0 %v222
  %260 = vmatprep.subr.mxu0 0.0
  %261 = vmatpush1.msra.mxu0 %v223
  %262 = vmatprep.subr.mxu0 0.0
  %263 = vmatpush1.msra.mxu0 %v224
  %264 = vmatprep.subr.mxu0 0.0
  %265 = vmatpush1.msra.mxu0 0.0
  %266 = vmatprep.subr.mxu0 0.0
  %267 = vmatpush1.msra.mxu0 0.0
  %268 = vmatprep.subr.mxu0 0.0
  %269 = vmatpush1.msra.mxu0 0.0
  %270 = vmatprep.subr.mxu0 0.0
  %271 = vmatpush1.msra.mxu0 0.0
  %272 = vmatprep.subr.mxu0 0.0
  %273 = vmatpush1.msra.mxu0 0.0
  %274 = vmatprep.subr.mxu0 0.0
  %275 = vmatpush1.msra.mxu0 0.0
  %276 = vmatprep.subr.mxu0 0.0
  %277 = vmatpush1.msra.mxu0 0.0
  %278 = vmatprep.subr.mxu0 0.0
  %279 = vmatpush1.msra.mxu0 0.0
  %280 = vmatprep.subr.mxu0 0.0
  %281 = vmatpush1.msra.mxu0 0.0
  %282 = vmatprep.subr.mxu0 0.0
  %283 = vmatpush1.msra.mxu0 0.0
  %284 = vmatprep.subr.mxu0 0.0
  %285 = vmatpush1.msra.mxu0 0.0
  %286 = vmatprep.subr.mxu0 0.0
  %287 = vmatpush1.msra.mxu0 0.0
  %288 = vmatprep.subr.mxu0 0.0
  %289 = vmatpush1.msra.mxu0 0.0
  %290 = vmatprep.subr.mxu0 0.0
  %291 = vmatpush1.msra.mxu0 0.0
  %292 = vmatprep.subr.mxu0 0.0
  %293 = vmatpush1.msra.mxu0 0.0
  %294 = vmatprep.subr.mxu0 0.0
  %295 = vmatpush1.msra.mxu0 0.0
  %296 = vmatprep.mubr.f32.mxu0 0.0
  %297 = vmatmul.mubr.f32.gmra.mrb[0].mxu0 %v201
  %v298 = vpop.f32.mrb[0].mxu0
  %v299 = vadd.f32 %v230, %v298
  %v300 = vpop.f32.mrb[0].mxu0
  %301 = vmatprep.mubr.f32.mxu0 0.0
  %302 = vmatmul.mubr.f32.gmra.mrb[0].mxu0 %v202
  %v303 = vpop.f32.mrb[0].mxu0
  %v304 = vadd.f32 %v230, %v303
  %v305 = vpop.f32.mrb[0].mxu0
  %306 = vmatprep.mubr.f32.mxu0 0.0
  %307 = vmatmul.mubr.f32.gmra.mrb[0].mxu0 %v203
  %v308 = vpop.f32.mrb[0].mxu0
  %v309 = vadd.f32 %v230, %v308
  %v310 = vpop.f32.mrb[0].mxu0
  %311 = vmatprep.mubr.f32.mxu0 0.0
  %312 = vmatmul.mubr.f32.gmra.mrb[0].mxu0 %v204
  %v313 = vpop.f32.mrb[0].mxu0
  %v314 = vadd.f32 %v230, %v313
  %v315 = vpop.f32.mrb[0].mxu0
  %316 = vmatprep.mubr.f32.mxu0 0.0
  %317 = vmatmul.mubr.f32.gmra.mrb[0].mxu0 %v205
  %v318 = vpop.f32.mrb[0].mxu0
  %v319 = vadd.f32 %v230, %v318
  %v320 = vpop.f32.mrb[0].mxu0
  %321 = vmatprep.mubr.f32.mxu0 0.0
  %322 = vmatmul.mubr.f32.gmra.mrb[0].mxu0 %v206
  %v323 = vpop.f32.mrb[0].mxu0
  %v324 = vadd.f32 %v230, %v323
  %v325 = vpop.f32.mrb[0].mxu0
  %326 = vmatprep.mubr.f32.mxu0 0.0
  %327 = vmatmul.mubr.f32.gmra.mrb[0].mxu0 %v207
  %v328 = vpop.f32.mrb[0].mxu0
  %v329 = vadd.f32 %v230, %v328
  %v330 = vpop.f32.mrb[0].mxu0
  %331 = vmatprep.mubr.f32.mxu0 0.0
  %332 = vmatmul.mubr.f32.gmra.mrb[0].mxu0 %v208
  %v333 = vpop.f32.mrb[0].mxu0
  %v334 = vadd.f32 %v230, %v333
  %v335 = vpop.f32.mrb[0].mxu0
  %336 = vdwg.mxu0
  %337 = vst.msk [vmem:[%s5] sm:$0xff] %vm39, %v299
  %338 = vst.msk [vmem:[%s5 + $0x8] sm:$0xff] %vm39, %v304
  %339 = vst.msk [vmem:[%s5 + $0x10] sm:$0xff] %vm39, %v309
  %340 = vst.msk [vmem:[%s5 + $0x18] sm:$0xff] %vm39, %v314
  %341 = vst.msk [vmem:[%s5 + $0x20] sm:$0xff] %vm39, %v319
  %342 = vst.msk [vmem:[%s5 + $0x28] sm:$0xff] %vm39, %v324
  %343 = vst.msk [vmem:[%s5 + $0x30] sm:$0xff] %vm39, %v329
  %344 = vst.msk [vmem:[%s5 + $0x38] sm:$0xff] %vm39, %v334
  // Predicated region
  $region22: #{tpu_custom_call.1} parent=0 // pred_check
    _
  $region23: #{tpu_custom_call.1} parent=0 // pred_check_branch
    %346 = sbr.rel (0) target = $region25
  $region24: #{tpu_custom_call.1} parent=0 // pred_region
    _
  $region25: #{tpu_custom_call.1} parent=0 // pred_fallthru
    _
  // Predicated region
  $region26: #{tpu_custom_call.1} parent=0 // pred_check
    _
  $region27: #{tpu_custom_call.1} parent=0 // pred_check_branch
    %348 = sbr.rel (0) target = $region29
  $region28: #{tpu_custom_call.1} parent=0 // pred_region
    _
  $region29: #{tpu_custom_call.1} parent=0 // pred_fallthru
    _

// kernel: tpu_custom_call.1
$region0: #{tpu_custom_call.1}
  #allocation0 [shape = 'u32[]', space=smem, size = 0x4, offset = 0x4, fixed_abs, tag = 'smem constant byte address 0x4 - core index']
  #allocation1 [shape = 'u32[144,128]{1,0:T(1,128)}', space=vmem, size = 0x12000, scoped, tag = 'internal scratch']
  %s0 = inlined_call_operand.vmem [shape: f32[64,32], index: 0, kind: input, shape index: {}]
  %s1 = inlined_call_operand.vmem [shape: f32[32,128], index: 1, kind: input, shape index: {}]
  %s2 = inlined_call_operand.vmem [shape: f32[1,128], index: 2, kind: input, shape index: {}]
  %s3 = inlined_call_operand.vmem [shape: f32[128,32], index: 3, kind: input, shape index: {}]
  %s4 = inlined_call_operand.vmem [shape: f32[1,32], index: 4, kind: input, shape index: {}]
  %s5 = inlined_call_operand.vmem [shape: f32[64,32], index: 5, kind: output, shape index: {}]
  %s6 = sld [smem:[#allocation0]]
  $region30: #{tpu_custom_call.1} parent=0
    _
  %s8 = ssub.s32 1, %s6
  %s9 = scalar_select 0, %s8, %s6
  // Predicated region
  $region2: #{tpu_custom_call.1} parent=0 // pred_check
    _
  $region3: #{tpu_custom_call.1} parent=0 // pred_check_branch
    %11 = sbr.rel (0) target = $region5
  $region4: #{tpu_custom_call.1} parent=0 // pred_region
    _
  $region5: #{tpu_custom_call.1} parent=0 // pred_fallthru
    _
  // Predicated region
  $region6: #{tpu_custom_call.1} parent=0 // pred_check
    _
  $region7: #{tpu_custom_call.1} parent=0 // pred_check_branch
    %13 = sbr.rel (0) target = $region9
  $region8: #{tpu_custom_call.1} parent=0 // pred_region
    _
  $region9: #{tpu_custom_call.1} parent=0 // pred_fallthru
    _
  // Predicated region
  $region10: #{tpu_custom_call.1} parent=0 // pred_check
    _
  $region11: #{tpu_custom_call.1} parent=0 // pred_check_branch
    %15 = sbr.rel (0) target = $region13
  $region12: #{tpu_custom_call.1} parent=0 // pred_region
    _
  $region13: #{tpu_custom_call.1} parent=0 // pred_fallthru
    _
  // Predicated region
  $region14: #{tpu_custom_call.1} parent=0 // pred_check
    _
  $region15: #{tpu_custom_call.1} parent=0 // pred_check_branch
    %17 = sbr.rel (0) target = $region17
  $region16: #{tpu_custom_call.1} parent=0 // pred_region
    _
  $region17: #{tpu_custom_call.1} parent=0 // pred_fallthru
    _
  // Predicated region
  $region18: #{tpu_custom_call.1} parent=0 // pred_check
    _
  $region19: #{tpu_custom_call.1} parent=0 // pred_check_branch
    %19 = sbr.rel (0) target = $region21
  $region20: #{tpu_custom_call.1} parent=0 // pred_region
    _
  $region21: #{tpu_custom_call.1} parent=0 // pred_fallthru
    _
  %v20 = vld [vmem:[%s0] sm:$0xff]
  %v21 = vld [vmem:[%s0 + $0x8] sm:$0xff]
  %v22 = vld [vmem:[%s0 + $0x10] sm:$0xff]
  %v23 = vld [vmem:[%s0 + $0x18] sm:$0xff]
  %v24 = vld [vmem:[%s0 + $0x20] sm:$0xff]
  %v25 = vld [vmem:[%s0 + $0x28] sm:$0xff]
  %v26 = vld [vmem:[%s0 + $0x30] sm:$0xff]
  %v27 = vld [vmem:[%s0 + $0x38] sm:$0xff]
  %v28 = vld [vmem:[%s1] sm:$0xff]
  %v29 = vld [vmem:[%s1 + $0x8] sm:$0xff]
  %v30 = vld [vmem:[%s1 + $0x10] sm:$0xff]
  %v31 = vld [vmem:[%s1 + $0x18] sm:$0xff]
  %v32 = vld [vmem:[%s2] sm:$0x1]
  %v34 = vlaneseq
  %v35 = vshrl.u32 %v34, 7
  %v36 = vsub.s32 0, %v35
  %v37 = vrot.slane %v32, %v36
  %vm39 = vcmask 261120
  %v41 = vsel %vm39, %v20, 0
  %v44 = vsel %vm39, %v21, 0
  %v47 = vsel %vm39, %v22, 0
  %v50 = vsel %vm39, %v23, 0
  %v53 = vsel %vm39, %v24, 0
  %v56 = vsel %vm39, %v25, 0
  %v59 = vsel %vm39, %v26, 0
  %v62 = vsel %vm39, %v27, 0
  %64 = vmatprep.subr.mxu0 0.0
  %65 = vmatpush1.msra.mxu0 %v28
  %66 = vmatprep.subr.mxu0 0.0
  %67 = vmatpush1.msra.mxu0 %v29
  %68 = vmatprep.subr.mxu0 0.0
  %69 = vmatpush1.msra.mxu0 %v30
  %70 = vmatprep.subr.mxu0 0.0
  %71 = vmatpush1.msra.mxu0 %v31
  %72 = vmatprep.subr.mxu0 0.0
  %73 = vmatpush1.msra.mxu0 0.0
  %74 = vmatprep.subr.mxu0 0.0
  %75 = vmatpush1.msra.mxu0 0.0
  %76 = vmatprep.subr.mxu0 0.0
  %77 = vmatpush1.msra.mxu0 0.0
  %78 = vmatprep.subr.mxu0 0.0
  %79 = vmatpush1.msra.mxu0 0.0
  %80 = vmatprep.subr.mxu0 0.0
  %81 = vmatpush1.msra.mxu0 0.0
  %82 = vmatprep.subr.mxu0 0.0
  %83 = vmatpush1.msra.mxu0 0.0
  %84 = vmatprep.subr.mxu0 0.0
  %85 = vmatpush1.msra.mxu0 0.0
  %86 = vmatprep.subr.mxu0 0.0
  %87 = vmatpush1.msra.mxu0 0.0
  %88 = vmatprep.subr.mxu0 0.0
  %89 = vmatpush1.msra.mxu0 0.0
  %90 = vmatprep.subr.mxu0 0.0
  %91 = vmatpush1.msra.mxu0 0.0
  %92 = vmatprep.subr.mxu0 0.0
  %93 = vmatpush1.msra.mxu0 0.0
  %94 = vmatprep.subr.mxu0 0.0
  %95 = vmatpush1.msra.mxu0 0.0
  %96 = vmatprep.subr.mxu0 0.0
  %97 = vmatpush1.msra.mxu0 0.0
  %98 = vmatprep.subr.mxu0 0.0
  %99 = vmatpush1.msra.mxu0 0.0
  %100 = vmatprep.subr.mxu0 0.0
  %101 = vmatpush1.msra.mxu0 0.0
  %102 = vmatprep.subr.mxu0 0.0
  %103 = vmatpush1.msra.mxu0 0.0
  %104 = vmatprep.subr.mxu0 0.0
  %105 = vmatpush1.msra.mxu0 0.0
  %106 = vmatprep.subr.mxu0 0.0
  %107 = vmatpush1.msra.mxu0 0.0
  %108 = vmatprep.subr.mxu0 0.0
  %109 = vmatpush1.msra.mxu0 0.0
  %110 = vmatprep.subr.mxu0 0.0
  %111 = vmatpush1.msra.mxu0 0.0
  %112 = vmatprep.subr.mxu0 0.0
  %113 = vmatpush1.msra.mxu0 0.0
  %114 = vmatprep.subr.mxu0 0.0
  %115 = vmatpush1.msra.mxu0 0.0
  %116 = vmatprep.subr.mxu0 0.0
  %117 = vmatpush1.msra.mxu0 0.0
  %118 = vmatprep.subr.mxu0 0.0
  %119 = vmatpush1.msra.mxu0 0.0
  %120 = vmatprep.subr.mxu0 0.0
  %121 = vmatpush1.msra.mxu0 0.0
  %122 = vmatprep.subr.mxu0 0.0
  %123 = vmatpush1.msra.mxu0 0.0
  %124 = vmatprep.subr.mxu0 0.0
  %125 = vmatpush1.msra.mxu0 0.0
  %126 = vmatprep.subr.mxu0 0.0
  %127 = vmatpush1.msra.mxu0 0.0
  %128 = vmatprep.mubr.f32.mxu0 0.0
  %129 = vmatmul.mubr.f32.gmra.mrb[0].mxu0 %v41
  %v130 = vpop.f32.mrb[0].mxu0
  %v131 = vadd.f32 %v37, %v130
  %v132 = vpop.f32.mrb[0].mxu0
  %133 = vmatprep.mubr.f32.mxu0 0.0
  %134 = vmatmul.mubr.f32.gmra.mrb[0].mxu0 %v44
  %v135 = vpop.f32.mrb[0].mxu0
  %v136 = vadd.f32 %v37, %v135
  %v137 = vpop.f32.mrb[0].mxu0
  %138 = vmatprep.mubr.f32.mxu0 0.0
  %139 = vmatmul.mubr.f32.gmra.mrb[0].mxu0 %v47
  %v140 = vpop.f32.mrb[0].mxu0
  %v141 = vadd.f32 %v37, %v140
  %v142 = vpop.f32.mrb[0].mxu0
  %143 = vmatprep.mubr.f32.mxu0 0.0
  %144 = vmatmul.mubr.f32.gmra.mrb[0].mxu0 %v50
  %v145 = vpop.f32.mrb[0].mxu0
  %v146 = vadd.f32 %v37, %v145
  %v147 = vpop.f32.mrb[0].mxu0
  %148 = vmatprep.mubr.f32.mxu0 0.0
  %149 = vmatmul.mubr.f32.gmra.mrb[0].mxu0 %v53
  %v150 = vpop.f32.mrb[0].mxu0
  %v151 = vadd.f32 %v37, %v150
  %v152 = vpop.f32.mrb[0].mxu0
  %153 = vmatprep.mubr.f32.mxu0 0.0
  %154 = vmatmul.mubr.f32.gmra.mrb[0].mxu0 %v56
  %v155 = vpop.f32.mrb[0].mxu0
  %v156 = vadd.f32 %v37, %v155
  %v157 = vpop.f32.mrb[0].mxu0
  %158 = vmatprep.mubr.f32.mxu0 0.0
  %159 = vmatmul.mubr.f32.gmra.mrb[0].mxu0 %v59
  %v160 = vpop.f32.mrb[0].mxu0
  %v161 = vadd.f32 %v37, %v160
  %v162 = vpop.f32.mrb[0].mxu0
  %163 = vmatprep.mubr.f32.mxu0 0.0
  %164 = vmatmul.mubr.f32.gmra.mrb[0].mxu0 %v62
  %v165 = vpop.f32.mrb[0].mxu0
  %v166 = vadd.f32 %v37, %v165
  %v167 = vpop.f32.mrb[0].mxu0
  %168 = vdwg.mxu0
  %v169 = vmul.f32 %v131, 0.5
  %v170 = vmul.f32 %v136, 0.5
  %v171 = vmul.f32 %v141, 0.5
  %v172 = vmul.f32 %v146, 0.5
  %v173 = vmul.f32 %v151, 0.5
  %v174 = vmul.f32 %v156, 0.5
  %v175 = vmul.f32 %v161, 0.5
  %v176 = vmul.f32 %v166, 0.5
  %v177 = vmul.f32 %v131, 0.70710677
  %v178 = vmul.f32 %v136, 0.70710677
  %v179 = vmul.f32 %v141, 0.70710677
  %v180 = vmul.f32 %v146, 0.70710677
  %v181 = vmul.f32 %v151, 0.70710677
  %v182 = vmul.f32 %v156, 0.70710677
  %v183 = vmul.f32 %v161, 0.70710677
  %v184 = vmul.f32 %v166, 0.70710677
  %v185 = verf.f32.pop %v177
  %v186 = verf.f32.pop %v178
  %v187 = verf.f32.pop %v179
  %v188 = verf.f32.pop %v180
  %v189 = verf.f32.pop %v181
  %v190 = verf.f32.pop %v182
  %v191 = verf.f32.pop %v183
  %v192 = verf.f32.pop %v184
  %v193 = vadd.f32 %v185, 1.0
  %v194 = vadd.f32 %v186, 1.0
  %v195 = vadd.f32 %v187, 1.0
  %v196 = vadd.f32 %v188, 1.0
  %v197 = vadd.f32 %v189, 1.0
  %v198 = vadd.f32 %v190, 1.0
  %v199 = vadd.f32 %v191, 1.0
  %v200 = vadd.f32 %v192, 1.0
  %v201 = vmul.f32 %v169, %v193
  %v202 = vmul.f32 %v170, %v194
  %v203 = vmul.f32 %v171, %v195
  %v204 = vmul.f32 %v172, %v196
  %v205 = vmul.f32 %v173, %v197
  %v206 = vmul.f32 %v174, %v198
  %v207 = vmul.f32 %v175, %v199
  %v208 = vmul.f32 %v176, %v200
  %v209 = vld [vmem:[%s3] sm:$0xff]
  %v210 = vld [vmem:[%s3 + $0x8] sm:$0xff]
  %v211 = vld [vmem:[%s3 + $0x10] sm:$0xff]
  %v212 = vld [vmem:[%s3 + $0x18] sm:$0xff]
  %v213 = vld [vmem:[%s3 + $0x20] sm:$0xff]
  %v214 = vld [vmem:[%s3 + $0x28] sm:$0xff]
  %v215 = vld [vmem:[%s3 + $0x30] sm:$0xff]
  %v216 = vld [vmem:[%s3 + $0x38] sm:$0xff]
  %v217 = vld [vmem:[%s3 + $0x40] sm:$0xff]
  %v218 = vld [vmem:[%s3 + $0x48] sm:$0xff]
  %v219 = vld [vmem:[%s3 + $0x50] sm:$0xff]
  %v220 = vld [vmem:[%s3 + $0x58] sm:$0xff]
  %v221 = vld [vmem:[%s3 + $0x60] sm:$0xff]
  %v222 = vld [vmem:[%s3 + $0x68] sm:$0xff]
  %v223 = vld [vmem:[%s3 + $0x70] sm:$0xff]
  %v224 = vld [vmem:[%s3 + $0x78] sm:$0xff]
  %v225 = vld [vmem:[%s4] sm:$0x1]
  %v227 = vlaneseq
  %v228 = vshrl.u32 %v227, 7
  %v229 = vsub.s32 0, %v228
  %v230 = vrot.slane %v225, %v229
  %232 = vmatprep.subr.mxu0 0.0
  %233 = vmatpush1.msra.mxu0 %v209
  %234 = vmatprep.subr.mxu0 0.0
  %235 = vmatpush1.msra.mxu0 %v210
  %236 = vmatprep.subr.mxu0 0.0
  %237 = vmatpush1.msra.mxu0 %v211
  %238 = vmatprep.subr.mxu0 0.0
  %239 = vmatpush1.msra.mxu0 %v212
  %240 = vmatprep.subr.mxu0 0.0
  %241 = vmatpush1.msra.mxu0 %v213
  %242 = vmatprep.subr.mxu0 0.0
  %243 = vmatpush1.msra.mxu0 %v214
  %244 = vmatprep.subr.mxu0 0.0
  %245 = vmatpush1.msra.mxu0 %v215
  %246 = vmatprep.subr.mxu0 0.0
  %247 = vmatpush1.msra.mxu0 %v216
  %248 = vmatprep.subr.mxu0 0.0
  %249 = vmatpush1.msra.mxu0 %v217
  %250 = vmatprep.subr.mxu0 0.0
  %251 = vmatpush1.msra.mxu0 %v218
  %252 = vmatprep.subr.mxu0 0.0
  %253 = vmatpush1.msra.mxu0 %v219
  %254 = vmatprep.subr.mxu0 0.0
  %255 = vmatpush1.msra.mxu0 %v220
  %256 = vmatprep.subr.mxu0 0.0
  %257 = vmatpush1.msra.mxu0 %v221
  %258 = vmatprep.subr.mxu0 0.0
  %259 = vmatpush1.msra.mxu0 %v222
  %260 = vmatprep.subr.mxu0 0.0
  %261 = vmatpush1.msra.mxu0 %v223
  %262 = vmatprep.subr.mxu0 0.0
  %263 = vmatpush1.msra.mxu0 %v224
  %264 = vmatprep.subr.mxu0 0.0
  %265 = vmatpush1.msra.mxu0 0.0
  %266 = vmatprep.subr.mxu0 0.0
  %267 = vmatpush1.msra.mxu0 0.0
  %268 = vmatprep.subr.mxu0 0.0
  %269 = vmatpush1.msra.mxu0 0.0
  %270 = vmatprep.subr.mxu0 0.0
  %271 = vmatpush1.msra.mxu0 0.0
  %272 = vmatprep.subr.mxu0 0.0
  %273 = vmatpush1.msra.mxu0 0.0
  %274 = vmatprep.subr.mxu0 0.0
  %275 = vmatpush1.msra.mxu0 0.0
  %276 = vmatprep.subr.mxu0 0.0
  %277 = vmatpush1.msra.mxu0 0.0
  %278 = vmatprep.subr.mxu0 0.0
  %279 = vmatpush1.msra.mxu0 0.0
  %280 = vmatprep.subr.mxu0 0.0
  %281 = vmatpush1.msra.mxu0 0.0
  %282 = vmatprep.subr.mxu0 0.0
  %283 = vmatpush1.msra.mxu0 0.0
  %284 = vmatprep.subr.mxu0 0.0
  %285 = vmatpush1.msra.mxu0 0.0
  %286 = vmatprep.subr.mxu0 0.0
  %287 = vmatpush1.msra.mxu0 0.0
  %288 = vmatprep.subr.mxu0 0.0
  %289 = vmatpush1.msra.mxu0 0.0
  %290 = vmatprep.subr.mxu0 0.0
  %291 = vmatpush1.msra.mxu0 0.0
  %292 = vmatprep.subr.mxu0 0.0
  %293 = vmatpush1.msra.mxu0 0.0
  %294 = vmatprep.subr.mxu0 0.0
  %295 = vmatpush1.msra.mxu0 0.0
  %296 = vmatprep.mubr.f32.mxu0 0.0
  %297 = vmatmul.mubr.f32.gmra.mrb[0].mxu0 %v201
  %v298 = vpop.f32.mrb[0].mxu0
  %v299 = vadd.f32 %v230, %v298
  %v300 = vpop.f32.mrb[0].mxu0
  %301 = vmatprep.mubr.f32.mxu0 0.0
  %302 = vmatmul.mubr.f32.gmra.mrb[0].mxu0 %v202
  %v303 = vpop.f32.mrb[0].mxu0
  %v304 = vadd.f32 %v230, %v303
  %v305 = vpop.f32.mrb[0].mxu0
  %306 = vmatprep.mubr.f32.mxu0 0.0
  %307 = vmatmul.mubr.f32.gmra.mrb[0].mxu0 %v203
  %v308 = vpop.f32.mrb[0].mxu0
  %v309 = vadd.f32 %v230, %v308
  %v310 = vpop.f32.mrb[0].mxu0
  %311 = vmatprep.mubr.f32.mxu0 0.0
  %312 = vmatmul.mubr.f32.gmra.mrb[0].mxu0 %v204
  %v313 = vpop.f32.mrb[0].mxu0
  %v314 = vadd.f32 %v230, %v313
  %v315 = vpop.f32.mrb[0].mxu0
  %316 = vmatprep.mubr.f32.mxu0 0.0
  %317 = vmatmul.mubr.f32.gmra.mrb[0].mxu0 %v205
  %v318 = vpop.f32.mrb[0].mxu0
  %v319 = vadd.f32 %v230, %v318
  %v320 = vpop.f32.mrb[0].mxu0
  %321 = vmatprep.mubr.f32.mxu0 0.0
  %322 = vmatmul.mubr.f32.gmra.mrb[0].mxu0 %v206
  %v323 = vpop.f32.mrb[0].mxu0
  %v324 = vadd.f32 %v230, %v323
  %v325 = vpop.f32.mrb[0].mxu0
  %326 = vmatprep.mubr.f32.mxu0 0.0
  %327 = vmatmul.mubr.f32.gmra.mrb[0].mxu0 %v207
  %v328 = vpop.f32.mrb[0].mxu0
  %v329 = vadd.f32 %v230, %v328
  %v330 = vpop.f32.mrb[0].mxu0
  %331 = vmatprep.mubr.f32.mxu0 0.0
  %332 = vmatmul.mubr.f32.gmra.mrb[0].mxu0 %v208
  %v333 = vpop.f32.mrb[0].mxu0
  %v334 = vadd.f32 %v230, %v333
  %v335 = vpop.f32.mrb[0].mxu0
  %336 = vdwg.mxu0
  %337 = vst.msk [vmem:[%s5] sm:$0xff] %vm39, %v299
  %338 = vst.msk [vmem:[%s5 + $0x8] sm:$0xff] %vm39, %v304
  %339 = vst.msk [vmem:[%s5 + $0x10] sm:$0xff] %vm39, %v309
  %340 = vst.msk [vmem:[%s5 + $0x18] sm:$0xff] %vm39, %v314
  %341 = vst.msk [vmem:[%s5 + $0x20] sm:$0xff] %vm39, %v319
  %342 = vst.msk [vmem:[%s5 + $0x28] sm:$0xff] %vm39, %v324
  %343 = vst.msk [vmem:[%s5 + $0x30] sm:$0xff] %vm39, %v329
  %344 = vst.msk [vmem:[%s5 + $0x38] sm:$0xff] %vm39, %v334
  // Predicated region
  $region22: #{tpu_custom_call.1} parent=0 // pred_check
    _
  $region23: #{tpu_custom_call.1} parent=0 // pred_check_branch
    %346 = sbr.rel (0) target = $region25
  $region24: #{tpu_custom_call.1} parent=0 // pred_region
    _
  $region25: #{tpu_custom_call.1} parent=0 // pred_fallthru
    _
  // Predicated region
  $region26: #{tpu_custom_call.1} parent=0 // pred_check
    _
  $region27: #{tpu_custom_call.1} parent=0 // pred_check_branch
    %348 = sbr.rel (0) target = $region29
  $region28: #{tpu_custom_call.1} parent=0 // pred_region
    _
  $region29: #{tpu_custom_call.1} parent=0 // pred_fallthru
    _

</llo_original>
